<compile_context>
chip_gen: v7x
topology: tpu7x:2x2x1
jax: 0.10.0
libtpu: 0.0.40
codegen_flags: <defaults>
</compile_context>

<pallas_src>
import functools

import jax
import jax.numpy as jnp
from jax.experimental import pallas as pl
from jax.experimental.pallas import tpu as pltpu


def _round_up(x: int, m: int) -> int:
    return (x + m - 1) // m * m


def _llama_mlp_kernel(x_ref, wgu_ref, wd_ref, o_ref, acc_ref):
    """One (token-tile, I-tile) step of the Llama MLP.

    x_ref   : (tm, Hp)        activations (compute dtype)
    wgu_ref : (1, Hp, 2*tn)   fused [gate | up] weight slab for this I-tile
    wd_ref  : (tn, Hp)        down-proj weight rows for this I-tile
    o_ref   : (tm, Hp)        output tile (written on last I step)
    acc_ref : (tm, Hp) f32    VMEM accumulator
    """
    j = pl.program_id(1)

    @pl.when(j == 0)
    def _():
        acc_ref[...] = jnp.zeros_like(acc_ref)

    x = x_ref[...]                                     # (tm, Hp)
    wgu = wgu_ref[0]                                   # (Hp, 2*tn)

    # Fused gate+up matmul -> f32, then split with static slices.
    gu = jnp.dot(x, wgu, preferred_element_type=jnp.float32)   # (tm, 2*tn)
    tn = gu.shape[-1] // 2
    gate = gu[:, :tn]
    up = gu[:, tn:]

    # SiLU in f32 (sigmoid -> EUP, mul -> VPU), cast only for the MXU input.
    inter = (gate * jax.nn.sigmoid(gate) * up).astype(wd_ref.dtype)  # (tm, tn)

    acc_ref[...] += jnp.dot(inter, wd_ref[...],
                            preferred_element_type=jnp.float32)     # (tm, Hp)

    @pl.when(j == pl.num_programs(1) - 1)
    def _():
        o_ref[...] = acc_ref[...].astype(o_ref.dtype)


def llama_mlp(x, w_gate, w_up, w_down, *, tm=None, tn=None,
              compute_dtype=None, vmem_limit_bytes=None):
    """Llama MLP forward.

    x       : (B, S, H)
    w_gate  : (I, H)  torch nn.Linear weight layout
    w_up    : (I, H)
    w_down  : (H, I)
    compute_dtype : dtype for MXU operands (e.g. jnp.bfloat16); defaults to
                    x.dtype.  Accumulation is always f32.
    """
    B, S, H = x.shape
    I = w_gate.shape[0]
    assert w_gate.shape == (I, H)
    assert w_up.shape == (I, H)
    assert w_down.shape == (H, I)

    T = B * S
    out_dtype = x.dtype
    if compute_dtype is None:
        compute_dtype = x.dtype

    # Tile sizes: multiples of 128 so the MXU stays full and (8,128) holds.
    if tm is None:
        tm = 256 if T >= 256 else 128
    if tn is None:
        tn = min(_round_up(I, 128), 2048)
    assert tm % 8 == 0 and tm % 128 == 0, "tm must be a multiple of 128"
    assert tn % 128 == 0, "tn must be a multiple of 128"

    # Padded problem sizes (no silent tail-token truncation).
    Tp = _round_up(T, tm)
    Hp = _round_up(H, 128)
    Ip = _round_up(I, tn)
    nT = Tp // tm
    nI = Ip // tn

    # --- wrapper-side layout prep (pad + cast + transpose to row-major GEMMs) ---
    x2 = x.reshape(T, H).astype(compute_dtype)
    x2 = jnp.pad(x2, ((0, Tp - T), (0, Hp - H)))

    wg_t = jnp.pad(w_gate.T.astype(compute_dtype), ((0, Hp - H), (0, Ip - I)))  # (Hp, Ip)
    wu_t = jnp.pad(w_up.T.astype(compute_dtype), ((0, Hp - H), (0, Ip - I)))    # (Hp, Ip)
    wd_t = jnp.pad(w_down.T.astype(compute_dtype), ((0, Ip - I), (0, Hp - H)))  # (Ip, Hp)

    # Fuse gate/up per I-tile into one lane-dense slab: (nI, Hp, 2*tn).
    wg_r = wg_t.reshape(Hp, nI, tn).transpose(1, 0, 2)   # (nI, Hp, tn)
    wu_r = wu_t.reshape(Hp, nI, tn).transpose(1, 0, 2)   # (nI, Hp, tn)
    wgu = jnp.concatenate([wg_r, wu_r], axis=-1)         # (nI, Hp, 2*tn)

    # --- VMEM budget (double-buffered blocks + f32 accumulator) ---
    isz = jnp.dtype(compute_dtype).itemsize
    osz = jnp.dtype(out_dtype).itemsize
    need = (
        2 * tm * Hp * isz          # x tile (double-buffered)
        + 2 * tm * Hp * osz        # out tile
        + 2 * Hp * (2 * tn) * isz  # fused gate/up weight tile
        + 2 * tn * Hp * isz        # down-proj weight tile
        + tm * Hp * 4              # f32 accumulator
    )
    if vmem_limit_bytes is None:
        vmem_limit_bytes = min(int(need * 1.5) + (4 << 20), 100 << 20)

    # --- cost estimate so XLA schedules surrounding ops sensibly ---
    cost = pl.CostEstimate(
        flops=2 * Tp * Hp * (2 * Ip) + 2 * Tp * Ip * Hp,
        transcendentals=Tp * Ip,
        bytes_accessed=(x2.size + wgu.size + wd_t.size) * isz + Tp * Hp * osz,
    )

    out2 = pl.pallas_call(
        _llama_mlp_kernel,
        out_shape=jax.ShapeDtypeStruct((Tp, Hp), out_dtype),
        grid_spec=pltpu.PrefetchScalarGridSpec(
            num_scalar_prefetch=0,
            grid=(nT, nI),
            in_specs=[
                pl.BlockSpec((tm, Hp), lambda i, j: (i, 0)),          # x: resident across j
                pl.BlockSpec((1, Hp, 2 * tn), lambda i, j: (j, 0, 0)),  # fused gate/up tile
                pl.BlockSpec((tn, Hp), lambda i, j: (j, 0)),           # down-proj tile
            ],
            out_specs=pl.BlockSpec((tm, Hp), lambda i, j: (i, 0)),     # resident across j
            scratch_shapes=[pltpu.VMEM((tm, Hp), jnp.float32)],
        ),
        compiler_params=pltpu.CompilerParams(
            dimension_semantics=("parallel", "arbitrary"),
            vmem_limit_bytes=vmem_limit_bytes,
        ),
        cost_estimate=cost,
    )(x2, wgu, wd_t)

    return out2[:T, :H].reshape(B, S, H)


# TODO(synk): the pretraining_tp > 1 branch of LlamaMLP is not implemented; it
# is mathematically identical to the tp == 1 path reproduced here.


if __name__ == "__main__":
    # Small config consistent with LlamaMLP: hidden_size=128, intermediate_size=256,
    # mlp_bias=False, hidden_act="silu", pretraining_tp=1.
    B, S, H, I = 2, 8, 128, 256
    key = jax.random.PRNGKey(0)
    kx, kg, ku, kd = jax.random.split(key, 4)

    x = jax.random.normal(kx, (B, S, H), dtype=jnp.float32)
    # torch nn.Linear weight shapes: gate/up (I, H), down (H, I)
    w_gate = jax.random.normal(kg, (I, H), dtype=jnp.float32) * 0.02
    w_up = jax.random.normal(ku, (I, H), dtype=jnp.float32) * 0.02
    w_down = jax.random.normal(kd, (H, I), dtype=jnp.float32) * 0.02

    # Pure-JAX reference.
    ref = (jax.nn.silu(x @ w_gate.T) * (x @ w_up.T)) @ w_down.T

    # f32 compute path: tight correctness check.
    out = llama_mlp(x, w_gate, w_up, w_down)
    out = jax.block_until_ready(out)
    assert jnp.allclose(out, ref, atol=1e-4, rtol=1e-4), "f32 mismatch vs reference"

    # bf16 MXU path (production configuration): loose check.
    out_bf16 = llama_mlp(x, w_gate, w_up, w_down, compute_dtype=jnp.bfloat16)
    out_bf16 = jax.block_until_ready(out_bf16)
    assert jnp.allclose(out_bf16.astype(jnp.float32), ref, atol=5e-2, rtol=5e-2), \
        "bf16 mismatch vs reference"

    print("KERNEL_OK")
</pallas_src>

<mosaic_0001>
module attributes {stable_mosaic.version = 11 : i64} {
  func.func @_llama_mlp_kernel(%arg0: i32, %arg1: i32, %arg2: memref<128x128xf32, #tpu.memory_space<vmem>>, %arg3: memref<1x128x512xf32, #tpu.memory_space<vmem>>, %arg4: memref<256x128xf32, #tpu.memory_space<vmem>>, %arg5: memref<128x128xf32, #tpu.memory_space<vmem>>, %arg6: memref<128x128xf32, #tpu.memory_space<vmem>>) attributes {dimension_semantics = [#tpu.dimension_semantics<parallel>, #tpu.dimension_semantics<arbitrary>], iteration_bounds = array<i64: 1, 1>, scalar_prefetch = 0 : i64, scratch_operands = 1 : i64, tpu.core_type = #tpu.core_type<tc>, window_params = [{transform_indices = @transform_0, window_bounds = array<i64: 128, 128>}, {transform_indices = @transform_1, window_bounds = array<i64: 1, 128, 512>}, {transform_indices = @transform_2, window_bounds = array<i64: 256, 128>}, {transform_indices = @transform_3, window_bounds = array<i64: 128, 128>}]} {
    %c0_i32 = arith.constant 0 : i32
    %0 = arith.cmpi eq, %arg1, %c0_i32 : i32
    %1 = arith.extui %0 : i1 to i32
    %c0_i32_0 = arith.constant 0 : i32
    %2 = arith.cmpi ne, %1, %c0_i32_0 : i32
    scf.if %2 {
      %cst_15 = arith.constant 0.000000e+00 : f32
      %24 = vector.broadcast %cst_15 : f32 to vector<128x128xf32>
      %c0_16 = arith.constant 0 : index
      %c0_17 = arith.constant 0 : index
      %25 = vector.load %arg6[%c0_16, %c0_17] : memref<128x128xf32, #tpu.memory_space<vmem>>, vector<128x128xf32>
      tpu.vector_store %arg6[%c0_16, %c0_17], %24 {strides = array<i32>} : memref<128x128xf32, #tpu.memory_space<vmem>>, vector<128x128xf32>,
    } else {
    }
    %c0 = arith.constant 0 : index
    %c0_1 = arith.constant 0 : index
    %3 = vector.load %arg2[%c0, %c0_1] : memref<128x128xf32, #tpu.memory_space<vmem>>, vector<128x128xf32>
    %c0_2 = arith.constant 0 : index
    %c0_3 = arith.constant 0 : index
    %c0_4 = arith.constant 0 : index
    %4 = vector.load %arg3[%c0_2, %c0_3, %c0_4] : memref<1x128x512xf32, #tpu.memory_space<vmem>>, vector<1x128x512xf32>
    %5 = vector.shape_cast %4 : vector<1x128x512xf32> to vector<128x512xf32>
    %cst = arith.constant dense<0.000000e+00> : vector<128x512xf32>
    %6 = tpu.matmul %3, %5, %cst {dimension_numbers = #tpu.dot_dimension_numbers<[1], [0], [0], [1], [0, 0, 1, 1], [], []>} : vector<128x128xf32>, vector<128x512xf32>, vector<128x512xf32> -> vector<128x512xf32>
    %7 = vector.extract_strided_slice %6 {offsets = [0, 0], sizes = [128, 256], strides = [1, 1]} : vector<128x512xf32> to vector<128x256xf32>
    %8 = vector.extract_strided_slice %6 {offsets = [0, 256], sizes = [128, 256], strides = [1, 1]} : vector<128x512xf32> to vector<128x256xf32>
    %9 = arith.negf %7 : vector<128x256xf32>
    %10 = math.exp %9 : vector<128x256xf32>
    %cst_5 = arith.constant 1.000000e+00 : f32
    %11 = vector.broadcast %cst_5 : f32 to vector<128x256xf32>
    %12 = arith.addf %11, %10 : vector<128x256xf32>
    %13 = arith.divf %11, %12 : vector<128x256xf32>
    %14 = arith.mulf %7, %13 : vector<128x256xf32>
    %15 = arith.mulf %14, %8 : vector<128x256xf32>
    %c0_6 = arith.constant 0 : index
    %c0_7 = arith.constant 0 : index
    %16 = vector.load %arg6[%c0_6, %c0_7] : memref<128x128xf32, #tpu.memory_space<vmem>>, vector<128x128xf32>
    %c0_8 = arith.constant 0 : index
    %c0_9 = arith.constant 0 : index
    %17 = vector.load %arg4[%c0_8, %c0_9] : memref<256x128xf32, #tpu.memory_space<vmem>>, vector<256x128xf32>
    %cst_10 = arith.constant dense<0.000000e+00> : vector<128x128xf32>
    %18 = tpu.matmul %15, %17, %cst_10 {dimension_numbers = #tpu.dot_dimension_numbers<[1], [0], [0], [1], [0, 0, 1, 1], [], []>} : vector<128x256xf32>, vector<256x128xf32>, vector<128x128xf32> -> vector<128x128xf32>
    %19 = arith.addf %16, %18 : vector<128x128xf32>
    %c0_11 = arith.constant 0 : index
    %c0_12 = arith.constant 0 : index
    %20 = vector.load %arg6[%c0_11, %c0_12] : memref<128x128xf32, #tpu.memory_space<vmem>>, vector<128x128xf32>
    tpu.vector_store %arg6[%c0_11, %c0_12], %19 {strides = array<i32>} : memref<128x128xf32, #tpu.memory_space<vmem>>, vector<128x128xf32>,
    %c0_i32_13 = arith.constant 0 : i32
    %21 = arith.cmpi eq, %arg1, %c0_i32_13 : i32
    %22 = arith.extui %21 : i1 to i32
    %c0_i32_14 = arith.constant 0 : i32
    %23 = arith.cmpi ne, %22, %c0_i32_14 : i32
    scf.if %23 {
      %c0_15 = arith.constant 0 : index
      %c0_16 = arith.constant 0 : index
      %24 = vector.load %arg6[%c0_15, %c0_16] : memref<128x128xf32, #tpu.memory_space<vmem>>, vector<128x128xf32>
      %c0_17 = arith.constant 0 : index
      %c0_18 = arith.constant 0 : index
      %25 = vector.load %arg5[%c0_17, %c0_18] : memref<128x128xf32, #tpu.memory_space<vmem>>, vector<128x128xf32>
      tpu.vector_store %arg5[%c0_17, %c0_18], %24 {strides = array<i32>} : memref<128x128xf32, #tpu.memory_space<vmem>>, vector<128x128xf32>,
    } else {
    }
    return
  }
  func.func @transform_0(%arg0: i32, %arg1: i32) -> (i32, i32) {
    %c0_i32 = arith.constant 0 : i32
    %c0_i32_0 = arith.constant 0 : i32
    return %arg0, %c0_i32 : i32, i32
  }
  func.func @transform_1(%arg0: i32, %arg1: i32) -> (i32, i32, i32) {
    %c0_i32 = arith.constant 0 : i32
    %c0_i32_0 = arith.constant 0 : i32
    %c0_i32_1 = arith.constant 0 : i32
    return %arg1, %c0_i32, %c0_i32_0 : i32, i32, i32
  }
  func.func @transform_2(%arg0: i32, %arg1: i32) -> (i32, i32) {
    %c0_i32 = arith.constant 0 : i32
    %c0_i32_0 = arith.constant 0 : i32
    return %arg1, %c0_i32 : i32, i32
  }
  func.func @transform_3(%arg0: i32, %arg1: i32) -> (i32, i32) {
    %c0_i32 = arith.constant 0 : i32
    %c0_i32_0 = arith.constant 0 : i32
    return %arg0, %c0_i32 : i32, i32
  }
}

</mosaic_0001>

<llo_original>
// kernel: tpu_custom_call.1
$region0: #{tpu_custom_call.1}
  #allocation0 [shape = 'u32[]', space=smem, size = 0x4, offset = 0x4, fixed_abs, tag = 'smem constant byte address 0x4 - core index']
  #allocation1 [shape = 'u32[144,128]{1,0:T(1,128)}', space=vmem, size = 0x12000, scoped, tag = 'internal scratch']
  #allocation2 [shape = 'f32[128,128]{1,0:T(8,128)}', space=vmem, size = 0x10000, scoped, tag = 'scratch operand']
  %s0 = inlined_call_operand.hbm [shape: f32[128,128], index: 0, kind: input, shape index: {}]
  %s1 = inlined_call_operand.hbm [shape: f32[1,128,512], index: 1, kind: input, shape index: {}]
  %s2 = inlined_call_operand.hbm [shape: f32[256,128], index: 2, kind: input, shape index: {}]
  %s3 = inlined_call_operand.hbm [shape: f32[128,128], index: 3, kind: output, shape index: {}]
  %s4 = sld [smem:[#allocation0]]
  $region42: #{tpu_custom_call.1} parent=0
    _
  %s6 = ssub.s32 1, %s4
  %s7 = scalar_select 0, %s6, %s4
  $region1: #{tpu_custom_call.1} parent=0
    #allocation3 [shape = 'u8[65536]{0}', space=vmem, size = 0x10000, scoped, tag = 'input window, operand 0, single buffered']
    #allocation4 [shape = 's32[1]{0}', space=sflag, size = 0x4, scoped, tag = 'scoped memory for tpu_custom_call.1']
    #allocation5 [shape = 's32[1]{0}', space=sflag, size = 0x4, scoped, tag = 'scoped memory for tpu_custom_call.1']
    #allocation6 [shape = 'u8[262144]{0}', space=vmem, size = 0x40000, scoped, tag = 'input window, operand 1, single buffered']
    #allocation7 [shape = 's32[1]{0}', space=sflag, size = 0x4, scoped, tag = 'scoped memory for tpu_custom_call.1']
    #allocation8 [shape = 'u8[131072]{0}', space=vmem, size = 0x20000, scoped, tag = 'input window, operand 2, single buffered']
    #allocation9 [shape = 'u8[65536]{0}', space=vmem, size = 0x10000, scoped, tag = 'output window, operand 0, single buffered']
    %8 = vsyncpa [#allocation4], 0
    %9 = vsyncpa [#allocation7], 0
    %10 = vsyncpa [#allocation5], 0
    // Predicated region
    $region2: #{tpu_custom_call.1} parent=1 // pred_check
      _
    $region3: #{tpu_custom_call.1} parent=1 // pred_check_branch
      %12 = sbr.rel (0) target = $region5
    $region4: #{tpu_custom_call.1} parent=1 // pred_region
      %s14 = ssub.s32 2048, 2048
      %15 = vsyncadd [#allocation4], %s14
      %s16 = sshll.u32 [#allocation3], 4
      %s17 = int_to_ptr.vmem [resolvable:$true] %s16
      %22 = dma.hbm_to_vmem [thread:$0]  %s0, 2048, %s17, [#allocation4], 128, 128, 8
    $region5: #{tpu_custom_call.1} parent=1 // pred_fallthru
      _
    // Predicated region
    $region6: #{tpu_custom_call.1} parent=1 // pred_check
      _
    $region7: #{tpu_custom_call.1} parent=1 // pred_check_branch
      %24 = sbr.rel (0) target = $region9
    $region8: #{tpu_custom_call.1} parent=1 // pred_region
      %s26 = ssub.s32 8192, 8192
      %27 = vsyncadd [#allocation7], %s26
      %s28 = sshll.u32 [#allocation6], 4
      %s29 = int_to_ptr.vmem [resolvable:$true] %s28
      %34 = dma.hbm_to_vmem [thread:$0]  %s1, 8192, %s29, [#allocation7], 512, 512, 32
    $region9: #{tpu_custom_call.1} parent=1 // pred_fallthru
      _
    // Predicated region
    $region10: #{tpu_custom_call.1} parent=1 // pred_check
      _
    $region11: #{tpu_custom_call.1} parent=1 // pred_check_branch
      %36 = sbr.rel (0) target = $region13
    $region12: #{tpu_custom_call.1} parent=1 // pred_region
      %s38 = ssub.s32 4096, 4096
      %39 = vsyncadd [#allocation7], %s38
      %s40 = sshll.u32 [#allocation8], 4
      %s41 = int_to_ptr.vmem [resolvable:$true] %s40
      %46 = dma.hbm_to_vmem [thread:$0]  %s2, 4096, %s41, [#allocation7], 128, 128, 8
    $region13: #{tpu_custom_call.1} parent=1 // pred_fallthru
      _
    // Predicated region
    $region14: #{tpu_custom_call.1} parent=1 // pred_check
      _
    $region15: #{tpu_custom_call.1} parent=1 // pred_check_branch
      %48 = sbr.rel (0) target = $region17
    $region16: #{tpu_custom_call.1} parent=1 // pred_region
      %49 = dma.done [#allocation4], 2048
    $region17: #{tpu_custom_call.1} parent=1 // pred_fallthru
      _
    // Predicated region
    $region18: #{tpu_custom_call.1} parent=1 // pred_check
      _
    $region19: #{tpu_custom_call.1} parent=1 // pred_check_branch
      %51 = sbr.rel (0) target = $region21
    $region20: #{tpu_custom_call.1} parent=1 // pred_region
      %52 = dma.done [#allocation7], 8192
    $region21: #{tpu_custom_call.1} parent=1 // pred_fallthru
      _
    // Predicated region
    $region22: #{tpu_custom_call.1} parent=1 // pred_check
      _
    $region23: #{tpu_custom_call.1} parent=1 // pred_check_branch
      %54 = sbr.rel (0) target = $region25
    $region24: #{tpu_custom_call.1} parent=1 // pred_region
      %55 = dma.done [#allocation7], 4096
    $region25: #{tpu_custom_call.1} parent=1 // pred_fallthru
      _
    %p56 = scmp.eq.s32.totalorder 0, 0
    // Predicated region
    $region26: #{tpu_custom_call.1} parent=1 // pred_check
      %p57 = pneg %p56
    $region27: #{tpu_custom_call.1} parent=1 // pred_check_branch
      %59 = sbr.rel (%p57) target = $region29
    $region28: #{tpu_custom_call.1} parent=1 // pred_region
      %60 = vst [vmem:[#allocation2] sm:$0xff] 0.0
      %61 = vst [vmem:[#allocation2 + $0x8] sm:$0xff] 0.0
      %62 = vst [vmem:[#allocation2 + $0x10] sm:$0xff] 0.0
      %63 = vst [vmem:[#allocation2 + $0x18] sm:$0xff] 0.0
      %64 = vst [vmem:[#allocation2 + $0x20] sm:$0xff] 0.0
      %65 = vst [vmem:[#allocation2 + $0x28] sm:$0xff] 0.0
      %66 = vst [vmem:[#allocation2 + $0x30] sm:$0xff] 0.0
      %67 = vst [vmem:[#allocation2 + $0x38] sm:$0xff] 0.0
      %68 = vst [vmem:[#allocation2 + $0x40] sm:$0xff] 0.0
      %69 = vst [vmem:[#allocation2 + $0x48] sm:$0xff] 0.0
      %70 = vst [vmem:[#allocation2 + $0x50] sm:$0xff] 0.0
      %71 = vst [vmem:[#allocation2 + $0x58] sm:$0xff] 0.0
      %72 = vst [vmem:[#allocation2 + $0x60] sm:$0xff] 0.0
      %73 = vst [vmem:[#allocation2 + $0x68] sm:$0xff] 0.0
      %74 = vst [vmem:[#allocation2 + $0x70] sm:$0xff] 0.0
      %75 = vst [vmem:[#allocation2 + $0x78] sm:$0xff] 0.0
    $region29: #{tpu_custom_call.1} parent=1 // pred_fallthru
      _
    %v76 = vld [vmem:[#allocation3] sm:$0xff]
    %v77 = vld [vmem:[#allocation3 + $0x8] sm:$0xff]
    %v78 = vld [vmem:[#allocation3 + $0x10] sm:$0xff]
    %v79 = vld [vmem:[#allocation3 + $0x18] sm:$0xff]
    %v80 = vld [vmem:[#allocation3 + $0x20] sm:$0xff]
    %v81 = vld [vmem:[#allocation3 + $0x28] sm:$0xff]
    %v82 = vld [vmem:[#allocation3 + $0x30] sm:$0xff]
    %v83 = vld [vmem:[#allocation3 + $0x38] sm:$0xff]
    %v84 = vld [vmem:[#allocation3 + $0x40] sm:$0xff]
    %v85 = vld [vmem:[#allocation3 + $0x48] sm:$0xff]
    %v86 = vld [vmem:[#allocation3 + $0x50] sm:$0xff]
    %v87 = vld [vmem:[#allocation3 + $0x58] sm:$0xff]
    %v88 = vld [vmem:[#allocation3 + $0x60] sm:$0xff]
    %v89 = vld [vmem:[#allocation3 + $0x68] sm:$0xff]
    %v90 = vld [vmem:[#allocation3 + $0x70] sm:$0xff]
    %v91 = vld [vmem:[#allocation3 + $0x78] sm:$0xff]
    %v92 = vld [vmem:[#allocation6] sm:$0xff]
    %v93 = vld [vmem:[#allocation6 + $0x8] sm:$0xff]
    %v94 = vld [vmem:[#allocation6 + $0x10] sm:$0xff]
    %v95 = vld [vmem:[#allocation6 + $0x18] sm:$0xff]
    %v96 = vld [vmem:[#allocation6 + $0x20] sm:$0xff]
    %v97 = vld [vmem:[#allocation6 + $0x28] sm:$0xff]
    %v98 = vld [vmem:[#allocation6 + $0x30] sm:$0xff]
    %v99 = vld [vmem:[#allocation6 + $0x38] sm:$0xff]
    %v100 = vld [vmem:[#allocation6 + $0x40] sm:$0xff]
    %v101 = vld [vmem:[#allocation6 + $0x48] sm:$0xff]
    %v102 = vld [vmem:[#allocation6 + $0x50] sm:$0xff]
    %v103 = vld [vmem:[#allocation6 + $0x58] sm:$0xff]
    %v104 = vld [vmem:[#allocation6 + $0x60] sm:$0xff]
    %v105 = vld [vmem:[#allocation6 + $0x68] sm:$0xff]
    %v106 = vld [vmem:[#allocation6 + $0x70] sm:$0xff]
    %v107 = vld [vmem:[#allocation6 + $0x78] sm:$0xff]
    %v108 = vld [vmem:[#allocation6 + $0x80] sm:$0xff]
    %v109 = vld [vmem:[#allocation6 + $0x88] sm:$0xff]
    %v110 = vld [vmem:[#allocation6 + $0x90] sm:$0xff]
    %v111 = vld [vmem:[#allocation6 + $0x98] sm:$0xff]
    %v112 = vld [vmem:[#allocation6 + $0xa0] sm:$0xff]
    %v113 = vld [vmem:[#allocation6 + $0xa8] sm:$0xff]
    %v114 = vld [vmem:[#allocation6 + $0xb0] sm:$0xff]
    %v115 = vld [vmem:[#allocation6 + $0xb8] sm:$0xff]
    %v116 = vld [vmem:[#allocation6 + $0xc0] sm:$0xff]
    %v117 = vld [vmem:[#allocation6 + $0xc8] sm:$0xff]
    %v118 = vld [vmem:[#allocation6 + $0xd0] sm:$0xff]
    %v119 = vld [vmem:[#allocation6 + $0xd8] sm:$0xff]
    %v120 = vld [vmem:[#allocation6 + $0xe0] sm:$0xff]
    %v121 = vld [vmem:[#allocation6 + $0xe8] sm:$0xff]
    %v122 = vld [vmem:[#allocation6 + $0xf0] sm:$0xff]
    %v123 = vld [vmem:[#allocation6 + $0xf8] sm:$0xff]
    %v124 = vld [vmem:[#allocation6 + $0x100] sm:$0xff]
    %v125 = vld [vmem:[#allocation6 + $0x108] sm:$0xff]
    %v126 = vld [vmem:[#allocation6 + $0x110] sm:$0xff]
    %v127 = vld [vmem:[#allocation6 + $0x118] sm:$0xff]
    %v128 = vld [vmem:[#allocation6 + $0x120] sm:$0xff]
    %v129 = vld [vmem:[#allocation6 + $0x128] sm:$0xff]
    %v130 = vld [vmem:[#allocation6 + $0x130] sm:$0xff]
    %v131 = vld [vmem:[#allocation6 + $0x138] sm:$0xff]
    %v132 = vld [vmem:[#allocation6 + $0x140] sm:$0xff]
    %v133 = vld [vmem:[#allocation6 + $0x148] sm:$0xff]
    %v134 = vld [vmem:[#allocation6 + $0x150] sm:$0xff]
    %v135 = vld [vmem:[#allocation6 + $0x158] sm:$0xff]
    %v136 = vld [vmem:[#allocation6 + $0x160] sm:$0xff]
    %v137 = vld [vmem:[#allocation6 + $0x168] sm:$0xff]
    %v138 = vld [vmem:[#allocation6 + $0x170] sm:$0xff]
    %v139 = vld [vmem:[#allocation6 + $0x178] sm:$0xff]
    %v140 = vld [vmem:[#allocation6 + $0x180] sm:$0xff]
    %v141 = vld [vmem:[#allocation6 + $0x188] sm:$0xff]
    %v142 = vld [vmem:[#allocation6 + $0x190] sm:$0xff]
    %v143 = vld [vmem:[#allocation6 + $0x198] sm:$0xff]
    %v144 = vld [vmem:[#allocation6 + $0x1a0] sm:$0xff]
    %v145 = vld [vmem:[#allocation6 + $0x1a8] sm:$0xff]
    %v146 = vld [vmem:[#allocation6 + $0x1b0] sm:$0xff]
    %v147 = vld [vmem:[#allocation6 + $0x1b8] sm:$0xff]
    %v148 = vld [vmem:[#allocation6 + $0x1c0] sm:$0xff]
    %v149 = vld [vmem:[#allocation6 + $0x1c8] sm:$0xff]
    %v150 = vld [vmem:[#allocation6 + $0x1d0] sm:$0xff]
    %v151 = vld [vmem:[#allocation6 + $0x1d8] sm:$0xff]
    %v152 = vld [vmem:[#allocation6 + $0x1e0] sm:$0xff]
    %v153 = vld [vmem:[#allocation6 + $0x1e8] sm:$0xff]
    %v154 = vld [vmem:[#allocation6 + $0x1f0] sm:$0xff]
    %v155 = vld [vmem:[#allocation6 + $0x1f8] sm:$0xff]
    %156 = vmatprep.subr.mxu0 %v93
    %157 = vmatpush1.msra.mxu0 %v92
    %158 = vmatprep.subr.mxu0 %v97
    %159 = vmatpush1.msra.mxu0 %v96
    %160 = vmatprep.subr.mxu0 %v101
    %161 = vmatpush1.msra.mxu0 %v100
    %162 = vmatprep.subr.mxu0 %v105
    %163 = vmatpush1.msra.mxu0 %v104
    %164 = vmatprep.subr.mxu0 %v109
    %165 = vmatpush1.msra.mxu0 %v108
    %166 = vmatprep.subr.mxu0 %v113
    %167 = vmatpush1.msra.mxu0 %v112
    %168 = vmatprep.subr.mxu0 %v117
    %169 = vmatpush1.msra.mxu0 %v116
    %170 = vmatprep.subr.mxu0 %v121
    %171 = vmatpush1.msra.mxu0 %v120
    %172 = vmatprep.subr.mxu0 %v125
    %173 = vmatpush1.msra.mxu0 %v124
    %174 = vmatprep.subr.mxu0 %v129
    %175 = vmatpush1.msra.mxu0 %v128
    %176 = vmatprep.subr.mxu0 %v133
    %177 = vmatpush1.msra.mxu0 %v132
    %178 = vmatprep.subr.mxu0 %v137
    %179 = vmatpush1.msra.mxu0 %v136
    %180 = vmatprep.subr.mxu0 %v141
    %181 = vmatpush1.msra.mxu0 %v140
    %182 = vmatprep.subr.mxu0 %v145
    %183 = vmatpush1.msra.mxu0 %v144
    %184 = vmatprep.subr.mxu0 %v149
    %185 = vmatpush1.msra.mxu0 %v148
    %186 = vmatprep.subr.mxu0 %v153
    %187 = vmatpush1.msra.mxu0 %v152
    %188 = vmatprep.subr.mxu0 0.0
    %189 = vmatpush1.msra.mxu0 0.0
    %190 = vmatprep.subr.mxu0 0.0
    %191 = vmatpush1.msra.mxu0 0.0
    %192 = vmatprep.subr.mxu0 0.0
    %193 = vmatpush1.msra.mxu0 0.0
    %194 = vmatprep.subr.mxu0 0.0
    %195 = vmatpush1.msra.mxu0 0.0
    %196 = vmatprep.subr.mxu0 0.0
    %197 = vmatpush1.msra.mxu0 0.0
    %198 = vmatprep.subr.mxu0 0.0
    %199 = vmatpush1.msra.mxu0 0.0
    %200 = vmatprep.subr.mxu0 0.0
    %201 = vmatpush1.msra.mxu0 0.0
    %202 = vmatprep.subr.mxu0 0.0
    %203 = vmatpush1.msra.mxu0 0.0
    %204 = vmatprep.subr.mxu0 0.0
    %205 = vmatpush1.msra.mxu0 0.0
    %206 = vmatprep.subr.mxu0 0.0
    %207 = vmatpush1.msra.mxu0 0.0
    %208 = vmatprep.subr.mxu0 0.0
    %209 = vmatpush1.msra.mxu0 0.0
    %210 = vmatprep.subr.mxu0 0.0
    %211 = vmatpush1.msra.mxu0 0.0
    %212 = vmatprep.subr.mxu0 0.0
    %213 = vmatpush1.msra.mxu0 0.0
    %214 = vmatprep.subr.mxu0 0.0
    %215 = vmatpush1.msra.mxu0 0.0
    %216 = vmatprep.subr.mxu0 0.0
    %217 = vmatpush1.msra.mxu0 0.0
    %218 = vmatprep.subr.mxu0 0.0
    %219 = vmatpush1.msra.mxu0 0.0
    %220 = vmatprep.mubr.f32.mxu0 0.0
    %221 = vmatmul.mubr.f32.gmra.mrb[0].mxu0 %v76
    %v222 = vpop.f32.mrb[0].mxu0
    %v223 = vadd.f32 0.0, %v222
    %v224 = vpop.f32.mrb[0].mxu0
    %v225 = vadd.f32 0.0, %v224
    %226 = vmatprep.mubr.f32.mxu0 0.0
    %227 = vmatmul.mubr.f32.gmra.mrb[0].mxu0 %v77
    %v228 = vpop.f32.mrb[0].mxu0
    %v229 = vadd.f32 0.0, %v228
    %v230 = vpop.f32.mrb[0].mxu0
    %v231 = vadd.f32 0.0, %v230
    %232 = vmatprep.mubr.f32.mxu0 0.0
    %233 = vmatmul.mubr.f32.gmra.mrb[0].mxu0 %v78
    %v234 = vpop.f32.mrb[0].mxu0
    %v235 = vadd.f32 0.0, %v234
    %v236 = vpop.f32.mrb[0].mxu0
    %v237 = vadd.f32 0.0, %v236
    %238 = vmatprep.mubr.f32.mxu0 0.0
    %239 = vmatmul.mubr.f32.gmra.mrb[0].mxu0 %v79
    %v240 = vpop.f32.mrb[0].mxu0
    %v241 = vadd.f32 0.0, %v240
    %v242 = vpop.f32.mrb[0].mxu0
    %v243 = vadd.f32 0.0, %v242
    %244 = vmatprep.mubr.f32.mxu0 0.0
    %245 = vmatmul.mubr.f32.gmra.mrb[0].mxu0 %v80
    %v246 = vpop.f32.mrb[0].mxu0
    %v247 = vadd.f32 0.0, %v246
    %v248 = vpop.f32.mrb[0].mxu0
    %v249 = vadd.f32 0.0, %v248
    %250 = vmatprep.mubr.f32.mxu0 0.0
    %251 = vmatmul.mubr.f32.gmra.mrb[0].mxu0 %v81
    %v252 = vpop.f32.mrb[0].mxu0
    %v253 = vadd.f32 0.0, %v252
    %v254 = vpop.f32.mrb[0].mxu0
    %v255 = vadd.f32 0.0, %v254
    %256 = vmatprep.mubr.f32.mxu0 0.0
    %257 = vmatmul.mubr.f32.gmra.mrb[0].mxu0 %v82
    %v258 = vpop.f32.mrb[0].mxu0
    %v259 = vadd.f32 0.0, %v258
    %v260 = vpop.f32.mrb[0].mxu0
    %v261 = vadd.f32 0.0, %v260
    %262 = vmatprep.mubr.f32.mxu0 0.0
    %263 = vmatmul.mubr.f32.gmra.mrb[0].mxu0 %v83
    %v264 = vpop.f32.mrb[0].mxu0
    %v265 = vadd.f32 0.0, %v264
    %v266 = vpop.f32.mrb[0].mxu0
    %v267 = vadd.f32 0.0, %v266
    %268 = vmatprep.mubr.f32.mxu0 0.0
    %269 = vmatmul.mubr.f32.gmra.mrb[0].mxu0 %v84
    %v270 = vpop.f32.mrb[0].mxu0
    %v271 = vadd.f32 0.0, %v270
    %v272 = vpop.f32.mrb[0].mxu0
    %v273 = vadd.f32 0.0, %v272
    %274 = vmatprep.mubr.f32.mxu0 0.0
    %275 = vmatmul.mubr.f32.gmra.mrb[0].mxu0 %v85
    %v276 = vpop.f32.mrb[0].mxu0
    %v277 = vadd.f32 0.0, %v276
    %v278 = vpop.f32.mrb[0].mxu0
    %v279 = vadd.f32 0.0, %v278
    %280 = vmatprep.mubr.f32.mxu0 0.0
    %281 = vmatmul.mubr.f32.gmra.mrb[0].mxu0 %v86
    %v282 = vpop.f32.mrb[0].mxu0
    %v283 = vadd.f32 0.0, %v282
    %v284 = vpop.f32.mrb[0].mxu0
    %v285 = vadd.f32 0.0, %v284
    %286 = vmatprep.mubr.f32.mxu0 0.0
    %287 = vmatmul.mubr.f32.gmra.mrb[0].mxu0 %v87
    %v288 = vpop.f32.mrb[0].mxu0
    %v289 = vadd.f32 0.0, %v288
    %v290 = vpop.f32.mrb[0].mxu0
    %v291 = vadd.f32 0.0, %v290
    %292 = vmatprep.mubr.f32.mxu0 0.0
    %293 = vmatmul.mubr.f32.gmra.mrb[0].mxu0 %v88
    %v294 = vpop.f32.mrb[0].mxu0
    %v295 = vadd.f32 0.0, %v294
    %v296 = vpop.f32.mrb[0].mxu0
    %v297 = vadd.f32 0.0, %v296
    %298 = vmatprep.mubr.f32.mxu0 0.0
    %299 = vmatmul.mubr.f32.gmra.mrb[0].mxu0 %v89
    %v300 = vpop.f32.mrb[0].mxu0
    %v301 = vadd.f32 0.0, %v300
    %v302 = vpop.f32.mrb[0].mxu0
    %v303 = vadd.f32 0.0, %v302
    %304 = vmatprep.mubr.f32.mxu0 0.0
    %305 = vmatmul.mubr.f32.gmra.mrb[0].mxu0 %v90
    %v306 = vpop.f32.mrb[0].mxu0
    %v307 = vadd.f32 0.0, %v306
    %v308 = vpop.f32.mrb[0].mxu0
    %v309 = vadd.f32 0.0, %v308
    %310 = vmatprep.mubr.f32.mxu0 0.0
    %311 = vmatmul.mubr.f32.gmra.mrb[0].mxu0 %v91
    %v312 = vpop.f32.mrb[0].mxu0
    %v313 = vadd.f32 0.0, %v312
    %v314 = vpop.f32.mrb[0].mxu0
    %v315 = vadd.f32 0.0, %v314
    %316 = vdwg.mxu0
    %317 = vmatprep.subr.mxu0 %v95
    %318 = vmatpush1.msra.mxu0 %v94
    %319 = vmatprep.subr.mxu0 %v99
    %320 = vmatpush1.msra.mxu0 %v98
    %321 = vmatprep.subr.mxu0 %v103
    %322 = vmatpush1.msra.mxu0 %v102
    %323 = vmatprep.subr.mxu0 %v107
    %324 = vmatpush1.msra.mxu0 %v106
    %325 = vmatprep.subr.mxu0 %v111
    %326 = vmatpush1.msra.mxu0 %v110
    %327 = vmatprep.subr.mxu0 %v115
    %328 = vmatpush1.msra.mxu0 %v114
    %329 = vmatprep.subr.mxu0 %v119
    %330 = vmatpush1.msra.mxu0 %v118
    %331 = vmatprep.subr.mxu0 %v123
    %332 = vmatpush1.msra.mxu0 %v122
    %333 = vmatprep.subr.mxu0 %v127
    %334 = vmatpush1.msra.mxu0 %v126
    %335 = vmatprep.subr.mxu0 %v131
    %336 = vmatpush1.msra.mxu0 %v130
    %337 = vmatprep.subr.mxu0 %v135
    %338 = vmatpush1.msra.mxu0 %v134
    %339 = vmatprep.subr.mxu0 %v139
    %340 = vmatpush1.msra.mxu0 %v138
    %341 = vmatprep.subr.mxu0 %v143
    %342 = vmatpush1.msra.mxu0 %v142
    %343 = vmatprep.subr.mxu0 %v147
    %344 = vmatpush1.msra.mxu0 %v146
    %345 = vmatprep.subr.mxu0 %v151
    %346 = vmatpush1.msra.mxu0 %v150
    %347 = vmatprep.subr.mxu0 %v155
    %348 = vmatpush1.msra.mxu0 %v154
    %349 = vmatprep.subr.mxu0 0.0
    %350 = vmatpush1.msra.mxu0 0.0
    %351 = vmatprep.subr.mxu0 0.0
    %352 = vmatpush1.msra.mxu0 0.0
    %353 = vmatprep.subr.mxu0 0.0
    %354 = vmatpush1.msra.mxu0 0.0
    %355 = vmatprep.subr.mxu0 0.0
    %356 = vmatpush1.msra.mxu0 0.0
    %357 = vmatprep.subr.mxu0 0.0
    %358 = vmatpush1.msra.mxu0 0.0
    %359 = vmatprep.subr.mxu0 0.0
    %360 = vmatpush1.msra.mxu0 0.0
    %361 = vmatprep.subr.mxu0 0.0
    %362 = vmatpush1.msra.mxu0 0.0
    %363 = vmatprep.subr.mxu0 0.0
    %364 = vmatpush1.msra.mxu0 0.0
    %365 = vmatprep.subr.mxu0 0.0
    %366 = vmatpush1.msra.mxu0 0.0
    %367 = vmatprep.subr.mxu0 0.0
    %368 = vmatpush1.msra.mxu0 0.0
    %369 = vmatprep.subr.mxu0 0.0
    %370 = vmatpush1.msra.mxu0 0.0
    %371 = vmatprep.subr.mxu0 0.0
    %372 = vmatpush1.msra.mxu0 0.0
    %373 = vmatprep.subr.mxu0 0.0
    %374 = vmatpush1.msra.mxu0 0.0
    %375 = vmatprep.subr.mxu0 0.0
    %376 = vmatpush1.msra.mxu0 0.0
    %377 = vmatprep.subr.mxu0 0.0
    %378 = vmatpush1.msra.mxu0 0.0
    %379 = vmatprep.subr.mxu0 0.0
    %380 = vmatpush1.msra.mxu0 0.0
    %381 = vmatprep.mubr.f32.mxu0 0.0
    %382 = vmatmul.mubr.f32.gmra.mrb[0].mxu0 %v76
    %v383 = vpop.f32.mrb[0].mxu0
    %v384 = vadd.f32 0.0, %v383
    %v385 = vpop.f32.mrb[0].mxu0
    %v386 = vadd.f32 0.0, %v385
    %387 = vmatprep.mubr.f32.mxu0 0.0
    %388 = vmatmul.mubr.f32.gmra.mrb[0].mxu0 %v77
    %v389 = vpop.f32.mrb[0].mxu0
    %v390 = vadd.f32 0.0, %v389
    %v391 = vpop.f32.mrb[0].mxu0
    %v392 = vadd.f32 0.0, %v391
    %393 = vmatprep.mubr.f32.mxu0 0.0
    %394 = vmatmul.mubr.f32.gmra.mrb[0].mxu0 %v78
    %v395 = vpop.f32.mrb[0].mxu0
    %v396 = vadd.f32 0.0, %v395
    %v397 = vpop.f32.mrb[0].mxu0
    %v398 = vadd.f32 0.0, %v397
    %399 = vmatprep.mubr.f32.mxu0 0.0
    %400 = vmatmul.mubr.f32.gmra.mrb[0].mxu0 %v79
    %v401 = vpop.f32.mrb[0].mxu0
    %v402 = vadd.f32 0.0, %v401
    %v403 = vpop.f32.mrb[0].mxu0
    %v404 = vadd.f32 0.0, %v403
    %405 = vmatprep.mubr.f32.mxu0 0.0
    %406 = vmatmul.mubr.f32.gmra.mrb[0].mxu0 %v80
    %v407 = vpop.f32.mrb[0].mxu0
    %v408 = vadd.f32 0.0, %v407
    %v409 = vpop.f32.mrb[0].mxu0
    %v410 = vadd.f32 0.0, %v409
    %411 = vmatprep.mubr.f32.mxu0 0.0
    %412 = vmatmul.mubr.f32.gmra.mrb[0].mxu0 %v81
    %v413 = vpop.f32.mrb[0].mxu0
    %v414 = vadd.f32 0.0, %v413
    %v415 = vpop.f32.mrb[0].mxu0
    %v416 = vadd.f32 0.0, %v415
    %417 = vmatprep.mubr.f32.mxu0 0.0
    %418 = vmatmul.mubr.f32.gmra.mrb[0].mxu0 %v82
    %v419 = vpop.f32.mrb[0].mxu0
    %v420 = vadd.f32 0.0, %v419
    %v421 = vpop.f32.mrb[0].mxu0
    %v422 = vadd.f32 0.0, %v421
    %423 = vmatprep.mubr.f32.mxu0 0.0
    %424 = vmatmul.mubr.f32.gmra.mrb[0].mxu0 %v83
    %v425 = vpop.f32.mrb[0].mxu0
    %v426 = vadd.f32 0.0, %v425
    %v427 = vpop.f32.mrb[0].mxu0
    %v428 = vadd.f32 0.0, %v427
    %429 = vmatprep.mubr.f32.mxu0 0.0
    %430 = vmatmul.mubr.f32.gmra.mrb[0].mxu0 %v84
    %v431 = vpop.f32.mrb[0].mxu0
    %v432 = vadd.f32 0.0, %v431
    %v433 = vpop.f32.mrb[0].mxu0
    %v434 = vadd.f32 0.0, %v433
    %435 = vmatprep.mubr.f32.mxu0 0.0
    %436 = vmatmul.mubr.f32.gmra.mrb[0].mxu0 %v85
    %v437 = vpop.f32.mrb[0].mxu0
    %v438 = vadd.f32 0.0, %v437
    %v439 = vpop.f32.mrb[0].mxu0
    %v440 = vadd.f32 0.0, %v439
    %441 = vmatprep.mubr.f32.mxu0 0.0
    %442 = vmatmul.mubr.f32.gmra.mrb[0].mxu0 %v86
    %v443 = vpop.f32.mrb[0].mxu0
    %v444 = vadd.f32 0.0, %v443
    %v445 = vpop.f32.mrb[0].mxu0
    %v446 = vadd.f32 0.0, %v445
    %447 = vmatprep.mubr.f32.mxu0 0.0
    %448 = vmatmul.mubr.f32.gmra.mrb[0].mxu0 %v87
    %v449 = vpop.f32.mrb[0].mxu0
    %v450 = vadd.f32 0.0, %v449
    %v451 = vpop.f32.mrb[0].mxu0
    %v452 = vadd.f32 0.0, %v451
    %453 = vmatprep.mubr.f32.mxu0 0.0
    %454 = vmatmul.mubr.f32.gmra.mrb[0].mxu0 %v88
    %v455 = vpop.f32.mrb[0].mxu0
    %v456 = vadd.f32 0.0, %v455
    %v457 = vpop.f32.mrb[0].mxu0
    %v458 = vadd.f32 0.0, %v457
    %459 = vmatprep.mubr.f32.mxu0 0.0
    %460 = vmatmul.mubr.f32.gmra.mrb[0].mxu0 %v89
    %v461 = vpop.f32.mrb[0].mxu0
    %v462 = vadd.f32 0.0, %v461
    %v463 = vpop.f32.mrb[0].mxu0
    %v464 = vadd.f32 0.0, %v463
    %465 = vmatprep.mubr.f32.mxu0 0.0
    %466 = vmatmul.mubr.f32.gmra.mrb[0].mxu0 %v90
    %v467 = vpop.f32.mrb[0].mxu0
    %v468 = vadd.f32 0.0, %v467
    %v469 = vpop.f32.mrb[0].mxu0
    %v470 = vadd.f32 0.0, %v469
    %471 = vmatprep.mubr.f32.mxu0 0.0
    %472 = vmatmul.mubr.f32.gmra.mrb[0].mxu0 %v91
    %v473 = vpop.f32.mrb[0].mxu0
    %v474 = vadd.f32 0.0, %v473
    %v475 = vpop.f32.mrb[0].mxu0
    %v476 = vadd.f32 0.0, %v475
    %477 = vdwg.mxu0
    %v478 = vxor.u32 %v223, 2147483648
    %v479 = vxor.u32 %v225, 2147483648
    %v480 = vxor.u32 %v229, 2147483648
    %v481 = vxor.u32 %v231, 2147483648
    %v482 = vxor.u32 %v235, 2147483648
    %v483 = vxor.u32 %v237, 2147483648
    %v484 = vxor.u32 %v241, 2147483648
    %v485 = vxor.u32 %v243, 2147483648
    %v486 = vxor.u32 %v247, 2147483648
    %v487 = vxor.u32 %v249, 2147483648
    %v488 = vxor.u32 %v253, 2147483648
    %v489 = vxor.u32 %v255, 2147483648
    %v490 = vxor.u32 %v259, 2147483648
    %v491 = vxor.u32 %v261, 2147483648
    %v492 = vxor.u32 %v265, 2147483648
    %v493 = vxor.u32 %v267, 2147483648
    %v494 = vxor.u32 %v271, 2147483648
    %v495 = vxor.u32 %v273, 2147483648
    %v496 = vxor.u32 %v277, 2147483648
    %v497 = vxor.u32 %v279, 2147483648
    %v498 = vxor.u32 %v283, 2147483648
    %v499 = vxor.u32 %v285, 2147483648
    %v500 = vxor.u32 %v289, 2147483648
    %v501 = vxor.u32 %v291, 2147483648
    %v502 = vxor.u32 %v295, 2147483648
    %v503 = vxor.u32 %v297, 2147483648
    %v504 = vxor.u32 %v301, 2147483648
    %v505 = vxor.u32 %v303, 2147483648
    %v506 = vxor.u32 %v307, 2147483648
    %v507 = vxor.u32 %v309, 2147483648
    %v508 = vxor.u32 %v313, 2147483648
    %v509 = vxor.u32 %v315, 2147483648
    %v510 = vmul.f32 %v478, 1.442695
    %v511 = vpow.pop %v510
    %v512 = vmul.f32 %v479, 1.442695
    %v513 = vpow.pop %v512
    %v514 = vmul.f32 %v480, 1.442695
    %v515 = vpow.pop %v514
    %v516 = vmul.f32 %v481, 1.442695
    %v517 = vpow.pop %v516
    %v518 = vmul.f32 %v482, 1.442695
    %v519 = vpow.pop %v518
    %v520 = vmul.f32 %v483, 1.442695
    %v521 = vpow.pop %v520
    %v522 = vmul.f32 %v484, 1.442695
    %v523 = vpow.pop %v522
    %v524 = vmul.f32 %v485, 1.442695
    %v525 = vpow.pop %v524
    %v526 = vmul.f32 %v486, 1.442695
    %v527 = vpow.pop %v526
    %v528 = vmul.f32 %v487, 1.442695
    %v529 = vpow.pop %v528
    %v530 = vmul.f32 %v488, 1.442695
    %v531 = vpow.pop %v530
    %v532 = vmul.f32 %v489, 1.442695
    %v533 = vpow.pop %v532
    %v534 = vmul.f32 %v490, 1.442695
    %v535 = vpow.pop %v534
    %v536 = vmul.f32 %v491, 1.442695
    %v537 = vpow.pop %v536
    %v538 = vmul.f32 %v492, 1.442695
    %v539 = vpow.pop %v538
    %v540 = vmul.f32 %v493, 1.442695
    %v541 = vpow.pop %v540
    %v542 = vmul.f32 %v494, 1.442695
    %v543 = vpow.pop %v542
    %v544 = vmul.f32 %v495, 1.442695
    %v545 = vpow.pop %v544
    %v546 = vmul.f32 %v496, 1.442695
    %v547 = vpow.pop %v546
    %v548 = vmul.f32 %v497, 1.442695
    %v549 = vpow.pop %v548
    %v550 = vmul.f32 %v498, 1.442695
    %v551 = vpow.pop %v550
    %v552 = vmul.f32 %v499, 1.442695
    %v553 = vpow.pop %v552
    %v554 = vmul.f32 %v500, 1.442695
    %v555 = vpow.pop %v554
    %v556 = vmul.f32 %v501, 1.442695
    %v557 = vpow.pop %v556
    %v558 = vmul.f32 %v502, 1.442695
    %v559 = vpow.pop %v558
    %v560 = vmul.f32 %v503, 1.442695
    %v561 = vpow.pop %v560
    %v562 = vmul.f32 %v504, 1.442695
    %v563 = vpow.pop %v562
    %v564 = vmul.f32 %v505, 1.442695
    %v565 = vpow.pop %v564
    %v566 = vmul.f32 %v506, 1.442695
    %v567 = vpow.pop %v566
    %v568 = vmul.f32 %v507, 1.442695
    %v569 = vpow.pop %v568
    %v570 = vmul.f32 %v508, 1.442695
    %v571 = vpow.pop %v570
    %v572 = vmul.f32 %v509, 1.442695
    %v573 = vpow.pop %v572
    %v574 = vadd.f32 %v511, 1.0
    %v575 = vadd.f32 %v513, 1.0
    %v576 = vadd.f32 %v515, 1.0
    %v577 = vadd.f32 %v517, 1.0
    %v578 = vadd.f32 %v519, 1.0
    %v579 = vadd.f32 %v521, 1.0
    %v580 = vadd.f32 %v523, 1.0
    %v581 = vadd.f32 %v525, 1.0
    %v582 = vadd.f32 %v527, 1.0
    %v583 = vadd.f32 %v529, 1.0
    %v584 = vadd.f32 %v531, 1.0
    %v585 = vadd.f32 %v533, 1.0
    %v586 = vadd.f32 %v535, 1.0
    %v587 = vadd.f32 %v537, 1.0
    %v588 = vadd.f32 %v539, 1.0
    %v589 = vadd.f32 %v541, 1.0
    %v590 = vadd.f32 %v543, 1.0
    %v591 = vadd.f32 %v545, 1.0
    %v592 = vadd.f32 %v547, 1.0
    %v593 = vadd.f32 %v549, 1.0
    %v594 = vadd.f32 %v551, 1.0
    %v595 = vadd.f32 %v553, 1.0
    %v596 = vadd.f32 %v555, 1.0
    %v597 = vadd.f32 %v557, 1.0
    %v598 = vadd.f32 %v559, 1.0
    %v599 = vadd.f32 %v561, 1.0
    %v600 = vadd.f32 %v563, 1.0
    %v601 = vadd.f32 %v565, 1.0
    %v602 = vadd.f32 %v567, 1.0
    %v603 = vadd.f32 %v569, 1.0
    %v604 = vadd.f32 %v571, 1.0
    %v605 = vadd.f32 %v573, 1.0
    %v606 = vrcp.pop %v574
    %v607 = vmul.f32 1.0, %v606
    %v608 = vrcp.pop %v575
    %v609 = vmul.f32 1.0, %v608
    %v610 = vrcp.pop %v576
    %v611 = vmul.f32 1.0, %v610
    %v612 = vrcp.pop %v577
    %v613 = vmul.f32 1.0, %v612
    %v614 = vrcp.pop %v578
    %v615 = vmul.f32 1.0, %v614
    %v616 = vrcp.pop %v579
    %v617 = vmul.f32 1.0, %v616
    %v618 = vrcp.pop %v580
    %v619 = vmul.f32 1.0, %v618
    %v620 = vrcp.pop %v581
    %v621 = vmul.f32 1.0, %v620
    %v622 = vrcp.pop %v582
    %v623 = vmul.f32 1.0, %v622
    %v624 = vrcp.pop %v583
    %v625 = vmul.f32 1.0, %v624
    %v626 = vrcp.pop %v584
    %v627 = vmul.f32 1.0, %v626
    %v628 = vrcp.pop %v585
    %v629 = vmul.f32 1.0, %v628
    %v630 = vrcp.pop %v586
    %v631 = vmul.f32 1.0, %v630
    %v632 = vrcp.pop %v587
    %v633 = vmul.f32 1.0, %v632
    %v634 = vrcp.pop %v588
    %v635 = vmul.f32 1.0, %v634
    %v636 = vrcp.pop %v589
    %v637 = vmul.f32 1.0, %v636
    %v638 = vrcp.pop %v590
    %v639 = vmul.f32 1.0, %v638
    %v640 = vrcp.pop %v591
    %v641 = vmul.f32 1.0, %v640
    %v642 = vrcp.pop %v592
    %v643 = vmul.f32 1.0, %v642
    %v644 = vrcp.pop %v593
    %v645 = vmul.f32 1.0, %v644
    %v646 = vrcp.pop %v594
    %v647 = vmul.f32 1.0, %v646
    %v648 = vrcp.pop %v595
    %v649 = vmul.f32 1.0, %v648
    %v650 = vrcp.pop %v596
    %v651 = vmul.f32 1.0, %v650
    %v652 = vrcp.pop %v597
    %v653 = vmul.f32 1.0, %v652
    %v654 = vrcp.pop %v598
    %v655 = vmul.f32 1.0, %v654
    %v656 = vrcp.pop %v599
    %v657 = vmul.f32 1.0, %v656
    %v658 = vrcp.pop %v600
    %v659 = vmul.f32 1.0, %v658
    %v660 = vrcp.pop %v601
    %v661 = vmul.f32 1.0, %v660
    %v662 = vrcp.pop %v602
    %v663 = vmul.f32 1.0, %v662
    %v664 = vrcp.pop %v603
    %v665 = vmul.f32 1.0, %v664
    %v666 = vrcp.pop %v604
    %v667 = vmul.f32 1.0, %v666
    %v668 = vrcp.pop %v605
    %v669 = vmul.f32 1.0, %v668
    %v670 = vmul.f32 %v223, %v607
    %v671 = vmul.f32 %v225, %v609
    %v672 = vmul.f32 %v229, %v611
    %v673 = vmul.f32 %v231, %v613
    %v674 = vmul.f32 %v235, %v615
    %v675 = vmul.f32 %v237, %v617
    %v676 = vmul.f32 %v241, %v619
    %v677 = vmul.f32 %v243, %v621
    %v678 = vmul.f32 %v247, %v623
    %v679 = vmul.f32 %v249, %v625
    %v680 = vmul.f32 %v253, %v627
    %v681 = vmul.f32 %v255, %v629
    %v682 = vmul.f32 %v259, %v631
    %v683 = vmul.f32 %v261, %v633
    %v684 = vmul.f32 %v265, %v635
    %v685 = vmul.f32 %v267, %v637
    %v686 = vmul.f32 %v271, %v639
    %v687 = vmul.f32 %v273, %v641
    %v688 = vmul.f32 %v277, %v643
    %v689 = vmul.f32 %v279, %v645
    %v690 = vmul.f32 %v283, %v647
    %v691 = vmul.f32 %v285, %v649
    %v692 = vmul.f32 %v289, %v651
    %v693 = vmul.f32 %v291, %v653
    %v694 = vmul.f32 %v295, %v655
    %v695 = vmul.f32 %v297, %v657
    %v696 = vmul.f32 %v301, %v659
    %v697 = vmul.f32 %v303, %v661
    %v698 = vmul.f32 %v307, %v663
    %v699 = vmul.f32 %v309, %v665
    %v700 = vmul.f32 %v313, %v667
    %v701 = vmul.f32 %v315, %v669
    %v702 = vmul.f32 %v670, %v384
    %v703 = vmul.f32 %v671, %v386
    %v704 = vmul.f32 %v672, %v390
    %v705 = vmul.f32 %v673, %v392
    %v706 = vmul.f32 %v674, %v396
    %v707 = vmul.f32 %v675, %v398
    %v708 = vmul.f32 %v676, %v402
    %v709 = vmul.f32 %v677, %v404
    %v710 = vmul.f32 %v678, %v408
    %v711 = vmul.f32 %v679, %v410
    %v712 = vmul.f32 %v680, %v414
    %v713 = vmul.f32 %v681, %v416
    %v714 = vmul.f32 %v682, %v420
    %v715 = vmul.f32 %v683, %v422
    %v716 = vmul.f32 %v684, %v426
    %v717 = vmul.f32 %v685, %v428
    %v718 = vmul.f32 %v686, %v432
    %v719 = vmul.f32 %v687, %v434
    %v720 = vmul.f32 %v688, %v438
    %v721 = vmul.f32 %v689, %v440
    %v722 = vmul.f32 %v690, %v444
    %v723 = vmul.f32 %v691, %v446
    %v724 = vmul.f32 %v692, %v450
    %v725 = vmul.f32 %v693, %v452
    %v726 = vmul.f32 %v694, %v456
    %v727 = vmul.f32 %v695, %v458
    %v728 = vmul.f32 %v696, %v462
    %v729 = vmul.f32 %v697, %v464
    %v730 = vmul.f32 %v698, %v468
    %v731 = vmul.f32 %v699, %v470
    %v732 = vmul.f32 %v700, %v474
    %v733 = vmul.f32 %v701, %v476
    %v734 = vld [vmem:[#allocation2] sm:$0xff]
    %v735 = vld [vmem:[#allocation2 + $0x8] sm:$0xff]
    %v736 = vld [vmem:[#allocation2 + $0x10] sm:$0xff]
    %v737 = vld [vmem:[#allocation2 + $0x18] sm:$0xff]
    %v738 = vld [vmem:[#allocation2 + $0x20] sm:$0xff]
    %v739 = vld [vmem:[#allocation2 + $0x28] sm:$0xff]
    %v740 = vld [vmem:[#allocation2 + $0x30] sm:$0xff]
    %v741 = vld [vmem:[#allocation2 + $0x38] sm:$0xff]
    %v742 = vld [vmem:[#allocation2 + $0x40] sm:$0xff]
    %v743 = vld [vmem:[#allocation2 + $0x48] sm:$0xff]
    %v744 = vld [vmem:[#allocation2 + $0x50] sm:$0xff]
    %v745 = vld [vmem:[#allocation2 + $0x58] sm:$0xff]
    %v746 = vld [vmem:[#allocation2 + $0x60] sm:$0xff]
    %v747 = vld [vmem:[#allocation2 + $0x68] sm:$0xff]
    %v748 = vld [vmem:[#allocation2 + $0x70] sm:$0xff]
    %v749 = vld [vmem:[#allocation2 + $0x78] sm:$0xff]
    %v750 = vld [vmem:[#allocation8] sm:$0xff]
    %v751 = vld [vmem:[#allocation8 + $0x8] sm:$0xff]
    %v752 = vld [vmem:[#allocation8 + $0x10] sm:$0xff]
    %v753 = vld [vmem:[#allocation8 + $0x18] sm:$0xff]
    %v754 = vld [vmem:[#allocation8 + $0x20] sm:$0xff]
    %v755 = vld [vmem:[#allocation8 + $0x28] sm:$0xff]
    %v756 = vld [vmem:[#allocation8 + $0x30] sm:$0xff]
    %v757 = vld [vmem:[#allocation8 + $0x38] sm:$0xff]
    %v758 = vld [vmem:[#allocation8 + $0x40] sm:$0xff]
    %v759 = vld [vmem:[#allocation8 + $0x48] sm:$0xff]
    %v760 = vld [vmem:[#allocation8 + $0x50] sm:$0xff]
    %v761 = vld [vmem:[#allocation8 + $0x58] sm:$0xff]
    %v762 = vld [vmem:[#allocation8 + $0x60] sm:$0xff]
    %v763 = vld [vmem:[#allocation8 + $0x68] sm:$0xff]
    %v764 = vld [vmem:[#allocation8 + $0x70] sm:$0xff]
    %v765 = vld [vmem:[#allocation8 + $0x78] sm:$0xff]
    %v766 = vld [vmem:[#allocation8 + $0x80] sm:$0xff]
    %v767 = vld [vmem:[#allocation8 + $0x88] sm:$0xff]
    %v768 = vld [vmem:[#allocation8 + $0x90] sm:$0xff]
    %v769 = vld [vmem:[#allocation8 + $0x98] sm:$0xff]
    %v770 = vld [vmem:[#allocation8 + $0xa0] sm:$0xff]
    %v771 = vld [vmem:[#allocation8 + $0xa8] sm:$0xff]
    %v772 = vld [vmem:[#allocation8 + $0xb0] sm:$0xff]
    %v773 = vld [vmem:[#allocation8 + $0xb8] sm:$0xff]
    %v774 = vld [vmem:[#allocation8 + $0xc0] sm:$0xff]
    %v775 = vld [vmem:[#allocation8 + $0xc8] sm:$0xff]
    %v776 = vld [vmem:[#allocation8 + $0xd0] sm:$0xff]
    %v777 = vld [vmem:[#allocation8 + $0xd8] sm:$0xff]
    %v778 = vld [vmem:[#allocation8 + $0xe0] sm:$0xff]
    %v779 = vld [vmem:[#allocation8 + $0xe8] sm:$0xff]
    %v780 = vld [vmem:[#allocation8 + $0xf0] sm:$0xff]
    %v781 = vld [vmem:[#allocation8 + $0xf8] sm:$0xff]
    %782 = vmatprep.subr.mxu0 0.0
    %783 = vmatpush1.msra.mxu0 %v750
    %784 = vmatprep.subr.mxu0 0.0
    %785 = vmatpush1.msra.mxu0 %v751
    %786 = vmatprep.subr.mxu0 0.0
    %787 = vmatpush1.msra.mxu0 %v752
    %788 = vmatprep.subr.mxu0 0.0
    %789 = vmatpush1.msra.mxu0 %v753
    %790 = vmatprep.subr.mxu0 0.0
    %791 = vmatpush1.msra.mxu0 %v754
    %792 = vmatprep.subr.mxu0 0.0
    %793 = vmatpush1.msra.mxu0 %v755
    %794 = vmatprep.subr.mxu0 0.0
    %795 = vmatpush1.msra.mxu0 %v756
    %796 = vmatprep.subr.mxu0 0.0
    %797 = vmatpush1.msra.mxu0 %v757
    %798 = vmatprep.subr.mxu0 0.0
    %799 = vmatpush1.msra.mxu0 %v758
    %800 = vmatprep.subr.mxu0 0.0
    %801 = vmatpush1.msra.mxu0 %v759
    %802 = vmatprep.subr.mxu0 0.0
    %803 = vmatpush1.msra.mxu0 %v760
    %804 = vmatprep.subr.mxu0 0.0
    %805 = vmatpush1.msra.mxu0 %v761
    %806 = vmatprep.subr.mxu0 0.0
    %807 = vmatpush1.msra.mxu0 %v762
    %808 = vmatprep.subr.mxu0 0.0
    %809 = vmatpush1.msra.mxu0 %v763
    %810 = vmatprep.subr.mxu0 0.0
    %811 = vmatpush1.msra.mxu0 %v764
    %812 = vmatprep.subr.mxu0 0.0
    %813 = vmatpush1.msra.mxu0 %v765
    %814 = vmatprep.subr.mxu0 0.0
    %815 = vmatpush1.msra.mxu0 %v766
    %816 = vmatprep.subr.mxu0 0.0
    %817 = vmatpush1.msra.mxu0 %v767
    %818 = vmatprep.subr.mxu0 0.0
    %819 = vmatpush1.msra.mxu0 %v768
    %820 = vmatprep.subr.mxu0 0.0
    %821 = vmatpush1.msra.mxu0 %v769
    %822 = vmatprep.subr.mxu0 0.0
    %823 = vmatpush1.msra.mxu0 %v770
    %824 = vmatprep.subr.mxu0 0.0
    %825 = vmatpush1.msra.mxu0 %v771
    %826 = vmatprep.subr.mxu0 0.0
    %827 = vmatpush1.msra.mxu0 %v772
    %828 = vmatprep.subr.mxu0 0.0
    %829 = vmatpush1.msra.mxu0 %v773
    %830 = vmatprep.subr.mxu0 0.0
    %831 = vmatpush1.msra.mxu0 %v774
    %832 = vmatprep.subr.mxu0 0.0
    %833 = vmatpush1.msra.mxu0 %v775
    %834 = vmatprep.subr.mxu0 0.0
    %835 = vmatpush1.msra.mxu0 %v776
    %836 = vmatprep.subr.mxu0 0.0
    %837 = vmatpush1.msra.mxu0 %v777
    %838 = vmatprep.subr.mxu0 0.0
    %839 = vmatpush1.msra.mxu0 %v778
    %840 = vmatprep.subr.mxu0 0.0
    %841 = vmatpush1.msra.mxu0 %v779
    %842 = vmatprep.subr.mxu0 0.0
    %843 = vmatpush1.msra.mxu0 %v780
    %844 = vmatprep.subr.mxu0 0.0
    %845 = vmatpush1.msra.mxu0 %v781
    %846 = vmatprep.mubr.f32.mxu0 %v703
    %847 = vmatmul.mubr.f32.gmra.mrb[0].mxu0 %v702
    %v848 = vpop.f32.mrb[0].mxu0
    %v849 = vadd.f32 0.0, %v848
    %v850 = vpop.f32.mrb[0].mxu0
    %851 = vmatprep.mubr.f32.mxu0 %v705
    %852 = vmatmul.mubr.f32.gmra.mrb[0].mxu0 %v704
    %v853 = vpop.f32.mrb[0].mxu0
    %v854 = vadd.f32 0.0, %v853
    %v855 = vpop.f32.mrb[0].mxu0
    %856 = vmatprep.mubr.f32.mxu0 %v707
    %857 = vmatmul.mubr.f32.gmra.mrb[0].mxu0 %v706
    %v858 = vpop.f32.mrb[0].mxu0
    %v859 = vadd.f32 0.0, %v858
    %v860 = vpop.f32.mrb[0].mxu0
    %861 = vmatprep.mubr.f32.mxu0 %v709
    %862 = vmatmul.mubr.f32.gmra.mrb[0].mxu0 %v708
    %v863 = vpop.f32.mrb[0].mxu0
    %v864 = vadd.f32 0.0, %v863
    %v865 = vpop.f32.mrb[0].mxu0
    %866 = vmatprep.mubr.f32.mxu0 %v711
    %867 = vmatmul.mubr.f32.gmra.mrb[0].mxu0 %v710
    %v868 = vpop.f32.mrb[0].mxu0
    %v869 = vadd.f32 0.0, %v868
    %v870 = vpop.f32.mrb[0].mxu0
    %871 = vmatprep.mubr.f32.mxu0 %v713
    %872 = vmatmul.mubr.f32.gmra.mrb[0].mxu0 %v712
    %v873 = vpop.f32.mrb[0].mxu0
    %v874 = vadd.f32 0.0, %v873
    %v875 = vpop.f32.mrb[0].mxu0
    %876 = vmatprep.mubr.f32.mxu0 %v715
    %877 = vmatmul.mubr.f32.gmra.mrb[0].mxu0 %v714
    %v878 = vpop.f32.mrb[0].mxu0
    %v879 = vadd.f32 0.0, %v878
    %v880 = vpop.f32.mrb[0].mxu0
    %881 = vmatprep.mubr.f32.mxu0 %v717
    %882 = vmatmul.mubr.f32.gmra.mrb[0].mxu0 %v716
    %v883 = vpop.f32.mrb[0].mxu0
    %v884 = vadd.f32 0.0, %v883
    %v885 = vpop.f32.mrb[0].mxu0
    %886 = vmatprep.mubr.f32.mxu0 %v719
    %887 = vmatmul.mubr.f32.gmra.mrb[0].mxu0 %v718
    %v888 = vpop.f32.mrb[0].mxu0
    %v889 = vadd.f32 0.0, %v888
    %v890 = vpop.f32.mrb[0].mxu0
    %891 = vmatprep.mubr.f32.mxu0 %v721
    %892 = vmatmul.mubr.f32.gmra.mrb[0].mxu0 %v720
    %v893 = vpop.f32.mrb[0].mxu0
    %v894 = vadd.f32 0.0, %v893
    %v895 = vpop.f32.mrb[0].mxu0
    %896 = vmatprep.mubr.f32.mxu0 %v723
    %897 = vmatmul.mubr.f32.gmra.mrb[0].mxu0 %v722
    %v898 = vpop.f32.mrb[0].mxu0
    %v899 = vadd.f32 0.0, %v898
    %v900 = vpop.f32.mrb[0].mxu0
    %901 = vmatprep.mubr.f32.mxu0 %v725
    %902 = vmatmul.mubr.f32.gmra.mrb[0].mxu0 %v724
    %v903 = vpop.f32.mrb[0].mxu0
    %v904 = vadd.f32 0.0, %v903
    %v905 = vpop.f32.mrb[0].mxu0
    %906 = vmatprep.mubr.f32.mxu0 %v727
    %907 = vmatmul.mubr.f32.gmra.mrb[0].mxu0 %v726
    %v908 = vpop.f32.mrb[0].mxu0
    %v909 = vadd.f32 0.0, %v908
    %v910 = vpop.f32.mrb[0].mxu0
    %911 = vmatprep.mubr.f32.mxu0 %v729
    %912 = vmatmul.mubr.f32.gmra.mrb[0].mxu0 %v728
    %v913 = vpop.f32.mrb[0].mxu0
    %v914 = vadd.f32 0.0, %v913
    %v915 = vpop.f32.mrb[0].mxu0
    %916 = vmatprep.mubr.f32.mxu0 %v731
    %917 = vmatmul.mubr.f32.gmra.mrb[0].mxu0 %v730
    %v918 = vpop.f32.mrb[0].mxu0
    %v919 = vadd.f32 0.0, %v918
    %v920 = vpop.f32.mrb[0].mxu0
    %921 = vmatprep.mubr.f32.mxu0 %v733
    %922 = vmatmul.mubr.f32.gmra.mrb[0].mxu0 %v732
    %v923 = vpop.f32.mrb[0].mxu0
    %v924 = vadd.f32 0.0, %v923
    %v925 = vpop.f32.mrb[0].mxu0
    %926 = vdwg.mxu0
    %v927 = vadd.f32 %v734, %v849
    %v928 = vadd.f32 %v735, %v854
    %v929 = vadd.f32 %v736, %v859
    %v930 = vadd.f32 %v737, %v864
    %v931 = vadd.f32 %v738, %v869
    %v932 = vadd.f32 %v739, %v874
    %v933 = vadd.f32 %v740, %v879
    %v934 = vadd.f32 %v741, %v884
    %v935 = vadd.f32 %v742, %v889
    %v936 = vadd.f32 %v743, %v894
    %v937 = vadd.f32 %v744, %v899
    %v938 = vadd.f32 %v745, %v904
    %v939 = vadd.f32 %v746, %v909
    %v940 = vadd.f32 %v747, %v914
    %v941 = vadd.f32 %v748, %v919
    %v942 = vadd.f32 %v749, %v924
    %943 = vst [vmem:[#allocation2] sm:$0xff] %v927
    %944 = vst [vmem:[#allocation2 + $0x8] sm:$0xff] %v928
    %945 = vst [vmem:[#allocation2 + $0x10] sm:$0xff] %v929
    %946 = vst [vmem:[#allocation2 + $0x18] sm:$0xff] %v930
    %947 = vst [vmem:[#allocation2 + $0x20] sm:$0xff] %v931
    %948 = vst [vmem:[#allocation2 + $0x28] sm:$0xff] %v932
    %949 = vst [vmem:[#allocation2 + $0x30] sm:$0xff] %v933
    %950 = vst [vmem:[#allocation2 + $0x38] sm:$0xff] %v934
    %951 = vst [vmem:[#allocation2 + $0x40] sm:$0xff] %v935
    %952 = vst [vmem:[#allocation2 + $0x48] sm:$0xff] %v936
    %953 = vst [vmem:[#allocation2 + $0x50] sm:$0xff] %v937
    %954 = vst [vmem:[#allocation2 + $0x58] sm:$0xff] %v938
    %955 = vst [vmem:[#allocation2 + $0x60] sm:$0xff] %v939
    %956 = vst [vmem:[#allocation2 + $0x68] sm:$0xff] %v940
    %957 = vst [vmem:[#allocation2 + $0x70] sm:$0xff] %v941
    %958 = vst [vmem:[#allocation2 + $0x78] sm:$0xff] %v942
    // Predicated region
    $region30: #{tpu_custom_call.1} parent=1 // pred_check
      %p959 = pneg %p56
    $region31: #{tpu_custom_call.1} parent=1 // pred_check_branch
      %961 = sbr.rel (%p959) target = $region33
    $region32: #{tpu_custom_call.1} parent=1 // pred_region
      %v962 = vld [vmem:[#allocation2] sm:$0xff]
      %v963 = vld [vmem:[#allocation2 + $0x8] sm:$0xff]
      %v964 = vld [vmem:[#allocation2 + $0x10] sm:$0xff]
      %v965 = vld [vmem:[#allocation2 + $0x18] sm:$0xff]
      %v966 = vld [vmem:[#allocation2 + $0x20] sm:$0xff]
      %v967 = vld [vmem:[#allocation2 + $0x28] sm:$0xff]
      %v968 = vld [vmem:[#allocation2 + $0x30] sm:$0xff]
      %v969 = vld [vmem:[#allocation2 + $0x38] sm:$0xff]
      %v970 = vld [vmem:[#allocation2 + $0x40] sm:$0xff]
      %v971 = vld [vmem:[#allocation2 + $0x48] sm:$0xff]
      %v972 = vld [vmem:[#allocation2 + $0x50] sm:$0xff]
      %v973 = vld [vmem:[#allocation2 + $0x58] sm:$0xff]
      %v974 = vld [vmem:[#allocation2 + $0x60] sm:$0xff]
      %v975 = vld [vmem:[#allocation2 + $0x68] sm:$0xff]
      %v976 = vld [vmem:[#allocation2 + $0x70] sm:$0xff]
      %v977 = vld [vmem:[#allocation2 + $0x78] sm:$0xff]
      %978 = vst [vmem:[#allocation9] sm:$0xff] %v962
      %979 = vst [vmem:[#allocation9 + $0x8] sm:$0xff] %v963
      %980 = vst [vmem:[#allocation9 + $0x10] sm:$0xff] %v964
      %981 = vst [vmem:[#allocation9 + $0x18] sm:$0xff] %v965
      %982 = vst [vmem:[#allocation9 + $0x20] sm:$0xff] %v966
      %983 = vst [vmem:[#allocation9 + $0x28] sm:$0xff] %v967
      %984 = vst [vmem:[#allocation9 + $0x30] sm:$0xff] %v968
      %985 = vst [vmem:[#allocation9 + $0x38] sm:$0xff] %v969
      %986 = vst [vmem:[#allocation9 + $0x40] sm:$0xff] %v970
      %987 = vst [vmem:[#allocation9 + $0x48] sm:$0xff] %v971
      %988 = vst [vmem:[#allocation9 + $0x50] sm:$0xff] %v972
      %989 = vst [vmem:[#allocation9 + $0x58] sm:$0xff] %v973
      %990 = vst [vmem:[#allocation9 + $0x60] sm:$0xff] %v974
      %991 = vst [vmem:[#allocation9 + $0x68] sm:$0xff] %v975
      %992 = vst [vmem:[#allocation9 + $0x70] sm:$0xff] %v976
      %993 = vst [vmem:[#allocation9 + $0x78] sm:$0xff] %v977
    $region33: #{tpu_custom_call.1} parent=1 // pred_fallthru
      _
    // Predicated region
    $region34: #{tpu_custom_call.1} parent=1 // pred_check
      _
    $region35: #{tpu_custom_call.1} parent=1 // pred_check_branch
      %995 = sbr.rel (0) target = $region37
    $region36: #{tpu_custom_call.1} parent=1 // pred_region
      %s997 = ssub.s32 2048, 2048
      %998 = vsyncadd [#allocation5], %s997
      %s999 = sshll.u32 [#allocation9], 4
      %s1000 = int_to_ptr.vmem [resolvable:$true] %s999
      %1005 = dma.vmem_to_hbm [thread:$0]  %s1000, 2048, %s3, [#allocation5], 128, 128, 8
    $region37: #{tpu_custom_call.1} parent=1 // pred_fallthru
      _
    // Predicated region
    $region38: #{tpu_custom_call.1} parent=1 // pred_check
      _
    $region39: #{tpu_custom_call.1} parent=1 // pred_check_branch
      %1007 = sbr.rel (0) target = $region41
    $region40: #{tpu_custom_call.1} parent=1 // pred_region
      %1008 = dma.done [#allocation5], 2048
    $region41: #{tpu_custom_call.1} parent=1 // pred_fallthru
      _
    %1009 = vsyncpa [#allocation4], 1
    %1010 = vsyncpa [#allocation7], 1
    %1011 = vsyncpa [#allocation5], 1

</llo_original>
